<compile_context>
chip_gen: v5e
topology: v5e:2x2
jax: 0.10.0
libtpu: 0.0.40
codegen_flags: <defaults>
</compile_context>

<pallas_src>
import functools

import jax
import jax.numpy as jnp
from jax.experimental import pallas as pl
from jax.experimental.pallas import tpu as pltpu

ALPHA = 1.67326
SCALE = 1.0507

_LANES = 128


def _device_kind() -> str:
    try:
        return jax.devices()[0].device_kind.lower()
    except Exception:
        return ""


def _vmem_capacity_bytes() -> int:
    try:
        return int(pltpu.get_tpu_info().vmem_capacity_bytes)
    except Exception:
        return 64 * 1024 * 1024  # conservative fallback: v7x per-TC VMEM


def _bf16_math_ok() -> bool:
    # bf16 VPU/EUP exist on v6e (Trillium) and v7x; v5e/v4 and older need f32 math.
    kind = _device_kind()
    if not kind:
        return False
    return not any(gen in kind for gen in ("v2", "v3", "v4", "v5"))


def _grid_semantics():
    # v7x has two TensorCores per chip: shard the grid axis across them.
    # Single-TC chips (v5e/v6e) keep plain "parallel".
    kind = _device_kind()
    if ("v7" in kind or "7x" in kind) and hasattr(pltpu, "CORE_PARALLEL"):
        return (pltpu.CORE_PARALLEL,)
    return ("parallel",)


def _welu_kernel(x_ref, o_ref, *, compute_dtype):
    x = x_ref[...].astype(compute_dtype)
    weighted = x * SCALE
    neg_branch = ALPHA * (jnp.exp(weighted) - 1.0)
    o_ref[...] = jnp.where(weighted < 0, neg_branch, weighted).astype(o_ref.dtype)


@jax.jit
def welu(x):
    """Apply WELU elementwise to an array of any shape (NCHW or otherwise)."""
    orig_shape = x.shape
    orig_dtype = x.dtype
    itemsize = jnp.dtype(orig_dtype).itemsize

    flat = x.reshape(-1)
    n = flat.shape[0]

    # Lane-dense (rows, 128) slab. When n is a multiple of 128 (common for NCHW
    # feature maps) this is a zero-copy reshape; the final row-block may be
    # ragged and Pallas masks it, so no whole-array padding is needed.
    n_pad = pl.cdiv(n, _LANES) * _LANES
    padded = n_pad != n
    if padded:
        # TODO(synk): replace this pad+slice (2 extra HBM passes) with an
        # in-kernel masked tail store (scalar-prefetch the true length).
        flat = jnp.pad(flat, (0, n_pad - n))
    rows = n_pad // _LANES
    x2d = flat.reshape(rows, _LANES)

    # ---- generation-aware tiling -------------------------------------------
    # Minimum sublane tile for the dtype: 8 (32-bit), 16 (16-bit), 32 (8-bit).
    sub = max(8, 32 // itemsize)
    vmem_cap = _vmem_capacity_bytes()
    vmem_limit = int(min(64 * 1024 * 1024, vmem_cap // 2))  # 64 MiB on v5e/v6e, 32 MiB on v7x
    # Double-buffered in + out footprint is 4 * tr * 128 * itemsize;
    # keep it under ~75% of the scoped VMEM limit.
    max_tr_budget = (vmem_limit * 3 // 4) // (4 * _LANES * itemsize)
    # ~8 MiB blocks amortize per-step overhead even at v7x's 3.2 TB/s HBM.
    target_tr = (8 * 1024 * 1024) // (_LANES * itemsize)
    tr = min(target_tr, max_tr_budget, rows)

    # Keep at least 4 grid steps when the slab is big enough: on v7x both TCs
    # then get >= 2 pipelined steps each; on v5e/v6e the extra steps are noise.
    min_steps = 4
    if rows >= min_steps * sub:
        tr = min(tr, pl.cdiv(rows, min_steps))

    if rows <= sub:
        tr = rows  # full extent (always a legal block shape)
    else:
        tr = max(sub, (tr // sub) * sub)

    grid = (pl.cdiv(rows, tr),)

    compute_dtype = (
        orig_dtype if (orig_dtype == jnp.bfloat16 and _bf16_math_ok()) else jnp.float32
    )

    out2d = pl.pallas_call(
        functools.partial(_welu_kernel, compute_dtype=compute_dtype),
        out_shape=jax.ShapeDtypeStruct((rows, _LANES), orig_dtype),
        grid_spec=pltpu.PrefetchScalarGridSpec(
            num_scalar_prefetch=0,
            grid=grid,
            in_specs=[pl.BlockSpec((tr, _LANES), lambda i: (i, 0))],
            out_specs=pl.BlockSpec((tr, _LANES), lambda i: (i, 0)),
        ),
        compiler_params=pltpu.CompilerParams(
            dimension_semantics=_grid_semantics(),
            vmem_limit_bytes=vmem_limit,
        ),
        cost_estimate=pl.CostEstimate(
            flops=5 * n_pad,
            transcendentals=n_pad,
            bytes_accessed=2 * n_pad * itemsize,
        ),
    )(x2d)

    out_flat = out2d.reshape(-1)
    if padded:
        out_flat = out_flat[:n]
    return out_flat.reshape(orig_shape)


def welu_ref(x):
    xf = x.astype(jnp.float32)
    weighted = xf * SCALE
    out = jnp.where(xf < 0, ALPHA * (jnp.exp(weighted) - 1.0), weighted)
    return out.astype(x.dtype)


if __name__ == "__main__":
    key = jax.random.PRNGKey(0)
    x = jax.random.normal(key, (2, 4, 16, 16), dtype=jnp.float32)  # NCHW

    out = jax.block_until_ready(welu(x))
    ref = welu_ref(x)
    assert out.shape == x.shape and out.dtype == x.dtype
    assert jnp.allclose(out, ref, atol=1e-6, rtol=1e-6), "f32 mismatch vs reference"

    # bf16 path: bf16 HBM traffic; bf16 math on v6e/v7x, f32 math on v5e/older.
    x_bf16 = x.astype(jnp.bfloat16)
    out_bf16 = jax.block_until_ready(welu(x_bf16))
    assert out_bf16.dtype == jnp.bfloat16 and out_bf16.shape == x.shape
    assert jnp.allclose(
        out_bf16.astype(jnp.float32),
        welu_ref(x_bf16).astype(jnp.float32),
        atol=2e-2,
        rtol=2e-2,
    ), "bf16 mismatch vs reference"

    print("KERNEL_OK")
</pallas_src>

<mosaic_0001>
module attributes {stable_mosaic.version = 11 : i64} {
  func.func @_welu_kernel(%arg0: i32, %arg1: memref<16x128xf32, #tpu.memory_space<vmem>>, %arg2: memref<16x128xf32, #tpu.memory_space<vmem>>) attributes {dimension_semantics = [#tpu.dimension_semantics<parallel>], iteration_bounds = array<i64: 1>, scalar_prefetch = 0 : i64, scratch_operands = 0 : i64, tpu.core_type = #tpu.core_type<tc>, window_params = [{transform_indices = @transform_0, window_bounds = array<i64: 16, 128>}, {transform_indices = @transform_1, window_bounds = array<i64: 16, 128>}]} {
    %c0 = arith.constant 0 : index
    %c0_0 = arith.constant 0 : index
    %0 = vector.load %arg1[%c0, %c0_0] : memref<16x128xf32, #tpu.memory_space<vmem>>, vector<16x128xf32>
    %cst = arith.constant 1.050700e+00 : f32
    %1 = vector.broadcast %cst : f32 to vector<16x128xf32>
    %2 = arith.mulf %0, %1 : vector<16x128xf32>
    %3 = math.exp %2 : vector<16x128xf32>
    %cst_1 = arith.constant 1.000000e+00 : f32
    %4 = vector.broadcast %cst_1 : f32 to vector<16x128xf32>
    %5 = arith.subf %3, %4 : vector<16x128xf32>
    %cst_2 = arith.constant 1.673260e+00 : f32
    %6 = vector.broadcast %cst_2 : f32 to vector<16x128xf32>
    %7 = arith.mulf %6, %5 : vector<16x128xf32>
    %cst_3 = arith.constant 0.000000e+00 : f32
    %8 = vector.broadcast %cst_3 : f32 to vector<16x128xf32>
    %9 = arith.cmpf olt, %2, %8 : vector<16x128xf32>
    %10 = arith.select %9, %7, %2 : vector<16x128xi1>, vector<16x128xf32>
    %c0_4 = arith.constant 0 : index
    %c0_5 = arith.constant 0 : index
    %11 = vector.load %arg2[%c0_4, %c0_5] : memref<16x128xf32, #tpu.memory_space<vmem>>, vector<16x128xf32>
    tpu.vector_store %arg2[%c0_4, %c0_5], %10 {strides = array<i32>} : memref<16x128xf32, #tpu.memory_space<vmem>>, vector<16x128xf32>,
    return
  }
  func.func @transform_0(%arg0: i32) -> (i32, i32) {
    %c0_i32 = arith.constant 0 : i32
    %c0_i32_0 = arith.constant 0 : i32
    return %arg0, %c0_i32 : i32, i32
  }
  func.func @transform_1(%arg0: i32) -> (i32, i32) {
    %c0_i32 = arith.constant 0 : i32
    %c0_i32_0 = arith.constant 0 : i32
    return %arg0, %c0_i32 : i32, i32
  }
}

</mosaic_0001>

<llo_original>
// kernel: welu.1
$region0: #{welu.1}
  #allocation0 [shape = 'u32[]', space=smem, size = 0x4, offset = 0x4, fixed_abs, tag = 'smem constant byte address 0x4 - core index']
  #allocation1 [shape = 'u32[72,128]{1,0:T(1,128)}', space=vmem, size = 0x9000, scoped, tag = 'internal scratch']
  %s0 = inlined_call_operand.vmem [shape: f32[16,128], index: 0, kind: input, shape index: {}]
  %s1 = inlined_call_operand.vmem [shape: f32[16,128], index: 1, kind: output, shape index: {}]
  %s2 = sld [smem:[#allocation0]]
  $region14: #{welu.1} parent=0
    _
  %s4 = ssub.s32 1, %s2
  %s5 = scalar_select 0, %s4, %s2
  // Predicated region
  $region2: #{welu.1} parent=0 // pred_check
    _
  $region3: #{welu.1} parent=0 // pred_check_branch
    %7 = sbr.rel (0) target = $region5
  $region4: #{welu.1} parent=0 // pred_region
    _
  $region5: #{welu.1} parent=0 // pred_fallthru
    _
  %v8 = vld [vmem:[%s0] sm:$0xff]
  %v9 = vld [vmem:[%s0 + $0x8] sm:$0xff]
  %v10 = vmul.f32 %v8, 1.0507
  %v11 = vmul.f32 %v9, 1.0507
  %v12 = vmul.f32 %v10, 1.442695
  %v13 = vpow.pop %v12
  %v14 = vmul.f32 %v11, 1.442695
  %v15 = vpow.pop %v14
  %v16 = vsub.f32 %v13, 1.0
  %v17 = vsub.f32 %v15, 1.0
  %v18 = vmul.f32 %v16, 1.67326
  %v19 = vmul.f32 %v17, 1.67326
  %vm20 = vcmp.lt.f32.partialorder %v10, 0.0
  %vm21 = vcmp.lt.f32.partialorder %v11, 0.0
  %v22 = vsel %vm20, %v18, %v10
  %v23 = vsel %vm21, %v19, %v11
  %24 = vst [vmem:[%s1] sm:$0xff] %v22
  %25 = vst [vmem:[%s1 + $0x8] sm:$0xff] %v23
  // Predicated region
  $region6: #{welu.1} parent=0 // pred_check
    _
  $region7: #{welu.1} parent=0 // pred_check_branch
    %27 = sbr.rel (0) target = $region9
  $region8: #{welu.1} parent=0 // pred_region
    _
  $region9: #{welu.1} parent=0 // pred_fallthru
    _
  // Predicated region
  $region10: #{welu.1} parent=0 // pred_check
    _
  $region11: #{welu.1} parent=0 // pred_check_branch
    %29 = sbr.rel (0) target = $region13
  $region12: #{welu.1} parent=0 // pred_region
    _
  $region13: #{welu.1} parent=0 // pred_fallthru
    _

</llo_original>
